<compile_context>
chip_gen: v5e
topology: v5e:2x2
jax: 0.10.0
libtpu: 0.0.40
codegen_flags: <defaults>
</compile_context>

<pallas_src>
import functools

import jax
import jax.numpy as jnp
from jax.experimental import pallas as pl
from jax.experimental.pallas import tpu as pltpu


def _round_up(n, m):
    return ((n + m - 1) // m) * m


def _choose_tile_b(batch):
    # Lane-dense output tiles -> multiples of 128.  512 rows amortizes the per-grid-step
    # pipeline overhead while staying tiny in VMEM, and keeps >=2 grid steps for batches
    # > 512 so v7x's two TensorCores both get work.
    return min(512, _round_up(max(batch, 1), 128))


def _deep_mean_kernel(x_ref, w1_ref, b1_ref, w2_ref, b2_ref, wv_ref, beff_ref, out_ref):
    """Fused: MLP feature extractor -> folded (mean head x cost weights) mat-vec.

    x_ref   : (tile_b, in_dim)   bf16
    w1_ref  : (in_dim, hid_p)    bf16    b1_ref : (1, hid_p)  f32
    w2_ref  : (hid_p, feat_p)    bf16    b2_ref : (1, feat_p) f32
    wv_ref  : (1, feat_p)        bf16    (mean_module weight pre-contracted with cost_weights)
    beff_ref: (1, 1)             f32     (sum_k cost_weights[k] * mean_bias[k])
    out_ref : (1, tile_b)        f32     lane-dense output slab
    """
    x = x_ref[...]
    # Hoist bias broadcasts once (JAX does not CSE broadcast_in_dim).
    b1 = b1_ref[...]
    b2 = b2_ref[...]
    beff = beff_ref[...]

    # nn_module: 2-layer ReLU MLP.  bf16 operands on the MXU, fp32 accumulate,
    # fp32 bias-add + ReLU on the VPU (v5e has no bf16 VALU path).
    h = jnp.dot(x, w1_ref[...], preferred_element_type=jnp.float32) + b1
    h = jnp.maximum(h, 0.0)
    f = jnp.dot(h.astype(jnp.bfloat16), w2_ref[...],
                preferred_element_type=jnp.float32) + b2
    f = jnp.maximum(f, 0.0)

    # Folded mean head: (1, feat_p) . (tile_b, feat_p)^T -> (1, tile_b)  (lane-dense).
    out = jax.lax.dot_general(
        wv_ref[...], f.astype(jnp.bfloat16),
        dimension_numbers=(((1,), (1,)), ((), ())),
        preferred_element_type=jnp.float32)
    out_ref[...] = out + beff


@functools.partial(jax.jit, static_argnames=("tile_b",))
def _deep_mean_impl(x, w1, b1, w2, b2, wm, bm, cw, *, tile_b):
    B, in_dim = x.shape
    hidden = w1.shape[1]
    feat = w2.shape[1]
    hid_p = _round_up(hidden, 128)
    feat_p = _round_up(feat, 128)

    # Fold mean head + cost weights into one row-vector and a scalar bias.
    wv = jnp.dot(cw, wm.T)                      # (1, feat)
    beff = jnp.sum(bm * cw).reshape(1, 1)       # (1, 1)

    # bf16 operands (MXU-native), zero-padded to full 128-lane vregs.  Padding is exact:
    # padded hidden/feat channels stay identically zero through the ReLUs and contribute 0.
    bf = jnp.bfloat16
    w1p = jnp.zeros((in_dim, hid_p), bf).at[:, :hidden].set(w1.astype(bf))
    b1p = jnp.zeros((1, hid_p), jnp.float32).at[:, :hidden].set(b1.astype(jnp.float32))
    w2p = jnp.zeros((hid_p, feat_p), bf).at[:hidden, :feat].set(w2.astype(bf))
    b2p = jnp.zeros((1, feat_p), jnp.float32).at[:, :feat].set(b2.astype(jnp.float32))
    wvp = jnp.zeros((1, feat_p), bf).at[:, :feat].set(wv.astype(bf))
    beff = beff.astype(jnp.float32)

    # Pad batch to a multiple of tile_b (no divisibility requirement on callers).
    Bp = _round_up(B, tile_b)
    xp = jnp.zeros((Bp, in_dim), bf).at[:B, :].set(x.astype(bf))

    grid = (Bp // tile_b,)
    full2d = lambda r, c: pl.BlockSpec((r, c), lambda i: (0, 0))

    out = pl.pallas_call(
        _deep_mean_kernel,
        out_shape=jax.ShapeDtypeStruct((1, Bp), jnp.float32),
        grid=grid,
        in_specs=[
            pl.BlockSpec((tile_b, in_dim), lambda i: (i, 0)),  # x: tiled over batch
            full2d(in_dim, hid_p),                             # w1 (resident)
            full2d(1, hid_p),                                  # b1
            full2d(hid_p, feat_p),                             # w2
            full2d(1, feat_p),                                 # b2
            full2d(1, feat_p),                                 # folded mean-head row
            full2d(1, 1),                                      # folded mean-head bias
        ],
        out_specs=pl.BlockSpec((1, tile_b), lambda i: (0, i)),  # lane-dense output slab
        compiler_params=pltpu.CompilerParams(
            dimension_semantics=("parallel",)),
    )(xp, w1p, b1p, w2p, b2p, wvp, beff)

    return out.reshape(Bp, 1)[:B]


def deep_mean_forward(x, params, tile_b=None):
    """x: (B, in_dim) float32 -> (B, 1) float32 cost-weighted deep mean."""
    if tile_b is None:
        tile_b = _choose_tile_b(x.shape[0])
    w1, b1, w2, b2, wm, bm, cw = params
    return _deep_mean_impl(x, w1, b1, w2, b2, wm, bm, cw, tile_b=tile_b)


def _reference_fp32(x, params):
    """Pure-fp32 reference of the module forward (original summation order)."""
    w1, b1, w2, b2, wm, bm, cw = params
    h = jnp.maximum(x @ w1 + b1, 0.0)
    f = jnp.maximum(h @ w2 + b2, 0.0)
    means = f @ wm + bm
    return jnp.sum(means * cw, axis=-1, keepdims=True)


def _reference_kernel_math(x, params):
    """Same math the kernel performs (bf16 operands, fp32 accumulate, folded head)."""
    w1, b1, w2, b2, wm, bm, cw = params
    bf = jnp.bfloat16
    wv = jnp.dot(cw, wm.T).astype(bf)
    beff = jnp.sum(bm * cw)
    h = jnp.maximum(
        jnp.dot(x.astype(bf), w1.astype(bf), preferred_element_type=jnp.float32) + b1, 0.0)
    f = jnp.maximum(
        jnp.dot(h.astype(bf), w2.astype(bf), preferred_element_type=jnp.float32) + b2, 0.0)
    return jnp.dot(f.astype(bf), wv.T, preferred_element_type=jnp.float32) + beff


if __name__ == "__main__":
    # Small shapes consistent with the module: flat GP inputs, MLP feature extractor,
    # per-task linear mean, cost-weight vector over tasks.
    B, in_dim, hidden, feat, n_tasks = 16, 16, 32, 8, 4

    key = jax.random.PRNGKey(0)
    ks = jax.random.split(key, 8)
    w1 = jax.random.normal(ks[0], (in_dim, hidden), jnp.float32) * 0.2
    b1 = jax.random.normal(ks[1], (1, hidden), jnp.float32) * 0.1
    w2 = jax.random.normal(ks[2], (hidden, feat), jnp.float32) * 0.2
    b2 = jax.random.normal(ks[3], (1, feat), jnp.float32) * 0.1
    wm = jax.random.normal(ks[4], (feat, n_tasks), jnp.float32) * 0.2
    bm = jax.random.normal(ks[5], (1, n_tasks), jnp.float32) * 0.1
    cw = jax.random.uniform(ks[6], (1, n_tasks), jnp.float32)
    x = jax.random.normal(ks[7], (B, in_dim), jnp.float32)

    params = (w1, b1, w2, b2, wm, bm, cw)

    out = deep_mean_forward(x, params)
    out = jax.block_until_ready(out)
    assert out.shape == (B, 1)

    # Tight check against a reference that performs the exact same math as the kernel.
    ref_same = _reference_kernel_math(x, params)
    assert jnp.allclose(out, ref_same, atol=1e-4, rtol=1e-4), (
        f"kernel-math mismatch: max abs err {jnp.max(jnp.abs(out - ref_same))}")

    # Loose check against the original fp32 module semantics (bf16 operand rounding only).
    ref_f32 = _reference_fp32(x, params)
    assert jnp.allclose(out, ref_f32, atol=1e-1, rtol=1e-1), (
        f"fp32-semantics mismatch: max abs err {jnp.max(jnp.abs(out - ref_f32))}")

    print("KERNEL_OK")
</pallas_src>

<mosaic_0001>
module attributes {stable_mosaic.version = 11 : i64} {
  func.func @_deep_mean_kernel(%arg0: i32, %arg1: memref<128x16xbf16, #tpu.memory_space<vmem>>, %arg2: memref<16x128xbf16, #tpu.memory_space<vmem>>, %arg3: memref<1x128xf32, #tpu.memory_space<vmem>>, %arg4: memref<128x128xbf16, #tpu.memory_space<vmem>>, %arg5: memref<1x128xf32, #tpu.memory_space<vmem>>, %arg6: memref<1x128xbf16, #tpu.memory_space<vmem>>, %arg7: memref<1x1xf32, #tpu.memory_space<vmem>>, %arg8: memref<1x128xf32, #tpu.memory_space<vmem>>) attributes {dimension_semantics = [#tpu.dimension_semantics<parallel>], iteration_bounds = array<i64: 1>, scalar_prefetch = 0 : i64, scratch_operands = 0 : i64, tpu.core_type = #tpu.core_type<tc>, window_params = [{transform_indices = @transform_0, window_bounds = array<i64: 128, 16>}, {pipeline_mode = #tpu.pipeline_mode<synchronous>, transform_indices = @transform_1, window_bounds = array<i64: 16, 128>}, {pipeline_mode = #tpu.pipeline_mode<synchronous>, transform_indices = @transform_2, window_bounds = array<i64: 1, 128>}, {pipeline_mode = #tpu.pipeline_mode<synchronous>, transform_indices = @transform_3, window_bounds = array<i64: 128, 128>}, {pipeline_mode = #tpu.pipeline_mode<synchronous>, transform_indices = @transform_4, window_bounds = array<i64: 1, 128>}, {pipeline_mode = #tpu.pipeline_mode<synchronous>, transform_indices = @transform_5, window_bounds = array<i64: 1, 128>}, {pipeline_mode = #tpu.pipeline_mode<synchronous>, transform_indices = @transform_6, window_bounds = array<i64: 1, 1>}, {transform_indices = @transform_7, window_bounds = array<i64: 1, 128>}]} {
    %c0 = arith.constant 0 : index
    %c0_0 = arith.constant 0 : index
    %0 = vector.load %arg1[%c0, %c0_0] : memref<128x16xbf16, #tpu.memory_space<vmem>>, vector<128x16xbf16>
    %c0_1 = arith.constant 0 : index
    %c0_2 = arith.constant 0 : index
    %1 = vector.load %arg3[%c0_1, %c0_2] : memref<1x128xf32, #tpu.memory_space<vmem>>, vector<1x128xf32>
    %c0_3 = arith.constant 0 : index
    %c0_4 = arith.constant 0 : index
    %2 = vector.load %arg5[%c0_3, %c0_4] : memref<1x128xf32, #tpu.memory_space<vmem>>, vector<1x128xf32>
    %c0_5 = arith.constant 0 : index
    %c0_6 = arith.constant 0 : index
    %3 = vector.load %arg7[%c0_5, %c0_6] : memref<1x1xf32, #tpu.memory_space<vmem>>, vector<1x1xf32>
    %c0_7 = arith.constant 0 : index
    %c0_8 = arith.constant 0 : index
    %4 = vector.load %arg2[%c0_7, %c0_8] : memref<16x128xbf16, #tpu.memory_space<vmem>>, vector<16x128xbf16>
    %cst = arith.constant dense<0.000000e+00> : vector<128x128xf32>
    %5 = tpu.matmul %0, %4, %cst {dimension_numbers = #tpu.dot_dimension_numbers<[1], [0], [0], [1], [0, 0, 1, 1], [], []>} : vector<128x16xbf16>, vector<16x128xbf16>, vector<128x128xf32> -> vector<128x128xf32>
    %6 = vector.broadcast %1 : vector<1x128xf32> to vector<128x128xf32>
    %7 = arith.addf %5, %6 : vector<128x128xf32>
    %cst_9 = arith.constant 0.000000e+00 : f32
    %8 = vector.broadcast %cst_9 : f32 to vector<128x128xf32>
    %9 = arith.maximumf %7, %8 : vector<128x128xf32>
    %10 = arith.truncf %9 : vector<128x128xf32> to vector<128x128xbf16>
    %c0_10 = arith.constant 0 : index
    %c0_11 = arith.constant 0 : index
    %11 = vector.load %arg4[%c0_10, %c0_11] : memref<128x128xbf16, #tpu.memory_space<vmem>>, vector<128x128xbf16>
    %cst_12 = arith.constant dense<0.000000e+00> : vector<128x128xf32>
    %12 = tpu.matmul %10, %11, %cst_12 {dimension_numbers = #tpu.dot_dimension_numbers<[1], [0], [0], [1], [0, 0, 1, 1], [], []>} : vector<128x128xbf16>, vector<128x128xbf16>, vector<128x128xf32> -> vector<128x128xf32>
    %13 = vector.broadcast %2 : vector<1x128xf32> to vector<128x128xf32>
    %14 = arith.addf %12, %13 : vector<128x128xf32>
    %cst_13 = arith.constant 0.000000e+00 : f32
    %15 = vector.broadcast %cst_13 : f32 to vector<128x128xf32>
    %16 = arith.maximumf %14, %15 : vector<128x128xf32>
    %c0_14 = arith.constant 0 : index
    %c0_15 = arith.constant 0 : index
    %17 = vector.load %arg6[%c0_14, %c0_15] : memref<1x128xbf16, #tpu.memory_space<vmem>>, vector<1x128xbf16>
    %18 = arith.truncf %16 : vector<128x128xf32> to vector<128x128xbf16>
    %cst_16 = arith.constant dense<0.000000e+00> : vector<1x128xf32>
    %19 = tpu.matmul %17, %18, %cst_16 {dimension_numbers = #tpu.dot_dimension_numbers<[1], [1], [0], [0], [0, 0, 1, 0], [], []>} : vector<1x128xbf16>, vector<128x128xbf16>, vector<1x128xf32> -> vector<1x128xf32>
    %20 = vector.broadcast %3 : vector<1x1xf32> to vector<1x128xf32>
    %21 = arith.addf %19, %20 : vector<1x128xf32>
    %c0_17 = arith.constant 0 : index
    %c0_18 = arith.constant 0 : index
    %22 = vector.load %arg8[%c0_17, %c0_18] : memref<1x128xf32, #tpu.memory_space<vmem>>, vector<1x128xf32>
    tpu.vector_store %arg8[%c0_17, %c0_18], %21 {strides = array<i32>} : memref<1x128xf32, #tpu.memory_space<vmem>>, vector<1x128xf32>,
    return
  }
  func.func @transform_0(%arg0: i32) -> (i32, i32) {
    %c0_i32 = arith.constant 0 : i32
    %c0_i32_0 = arith.constant 0 : i32
    return %arg0, %c0_i32 : i32, i32
  }
  func.func @transform_1(%arg0: i32) -> (i32, i32) {
    %c0_i32 = arith.constant 0 : i32
    %c0_i32_0 = arith.constant 0 : i32
    %c0_i32_1 = arith.constant 0 : i32
    return %c0_i32, %c0_i32_0 : i32, i32
  }
  func.func @transform_2(%arg0: i32) -> (i32, i32) {
    %c0_i32 = arith.constant 0 : i32
    %c0_i32_0 = arith.constant 0 : i32
    %c0_i32_1 = arith.constant 0 : i32
    return %c0_i32, %c0_i32_0 : i32, i32
  }
  func.func @transform_3(%arg0: i32) -> (i32, i32) {
    %c0_i32 = arith.constant 0 : i32
    %c0_i32_0 = arith.constant 0 : i32
    %c0_i32_1 = arith.constant 0 : i32
    return %c0_i32, %c0_i32_0 : i32, i32
  }
  func.func @transform_4(%arg0: i32) -> (i32, i32) {
    %c0_i32 = arith.constant 0 : i32
    %c0_i32_0 = arith.constant 0 : i32
    %c0_i32_1 = arith.constant 0 : i32
    return %c0_i32, %c0_i32_0 : i32, i32
  }
  func.func @transform_5(%arg0: i32) -> (i32, i32) {
    %c0_i32 = arith.constant 0 : i32
    %c0_i32_0 = arith.constant 0 : i32
    %c0_i32_1 = arith.constant 0 : i32
    return %c0_i32, %c0_i32_0 : i32, i32
  }
  func.func @transform_6(%arg0: i32) -> (i32, i32) {
    %c0_i32 = arith.constant 0 : i32
    %c0_i32_0 = arith.constant 0 : i32
    %c0_i32_1 = arith.constant 0 : i32
    return %c0_i32, %c0_i32_0 : i32, i32
  }
  func.func @transform_7(%arg0: i32) -> (i32, i32) {
    %c0_i32 = arith.constant 0 : i32
    %c0_i32_0 = arith.constant 0 : i32
    return %c0_i32, %arg0 : i32, i32
  }
}

</mosaic_0001>

<llo_original>
// kernel: _deep_mean_impl.1
$region0: #{_deep_mean_impl.1}
  #allocation0 [shape = 'u32[]', space=smem, size = 0x4, offset = 0x4, fixed_abs, tag = 'smem constant byte address 0x4 - core index']
  #allocation1 [shape = 'u32[72,128]{1,0:T(1,128)}', space=vmem, size = 0x9000, scoped, tag = 'internal scratch']
  #allocation2 [shape = 'f32[1,1]{1,0:T(1,128)S(1)}', space=vmem, size = 0x200, scoped, tag = 'scoped memory for _deep_mean_impl.1']
  %s0 = inlined_call_operand.vmem [shape: bf16[128,16], index: 0, kind: input, shape index: {}]
  %s1 = inlined_call_operand.vmem [shape: bf16[16,128], index: 1, kind: input, shape index: {}]
  %s2 = inlined_call_operand.vmem [shape: f32[1,128], index: 2, kind: input, shape index: {}]
  %s3 = inlined_call_operand.vmem [shape: bf16[128,128], index: 3, kind: input, shape index: {}]
  %s4 = inlined_call_operand.vmem [shape: f32[1,128], index: 4, kind: input, shape index: {}]
  %s5 = inlined_call_operand.vmem [shape: bf16[1,128], index: 5, kind: input, shape index: {}]
  %s6 = inlined_call_operand.<no memory space> [shape: f32[1,1], index: 6, kind: input, shape index: {}]
  %s7 = inlined_call_operand.vmem [shape: f32[1,128], index: 7, kind: output, shape index: {}]
  %s8 = sld [smem:[#allocation0]]
  $region38: #{_deep_mean_impl.1} parent=0
    _
  %s10 = ssub.s32 1, %s8
  %s11 = scalar_select 0, %s10, %s8
  %v12 = vstv %s6
  %13 = vst [vmem:[#allocation2] sm:$0x1] %v12
  // Predicated region
  $region2: #{_deep_mean_impl.1} parent=0 // pred_check
    _
  $region3: #{_deep_mean_impl.1} parent=0 // pred_check_branch
    %15 = sbr.rel (0) target = $region5
  $region4: #{_deep_mean_impl.1} parent=0 // pred_region
    _
  $region5: #{_deep_mean_impl.1} parent=0 // pred_fallthru
    _
  // Predicated region
  $region6: #{_deep_mean_impl.1} parent=0 // pred_check
    _
  $region7: #{_deep_mean_impl.1} parent=0 // pred_check_branch
    %17 = sbr.rel (0) target = $region9
  $region8: #{_deep_mean_impl.1} parent=0 // pred_region
    _
  $region9: #{_deep_mean_impl.1} parent=0 // pred_fallthru
    _
  // Predicated region
  $region10: #{_deep_mean_impl.1} parent=0 // pred_check
    _
  $region11: #{_deep_mean_impl.1} parent=0 // pred_check_branch
    %19 = sbr.rel (0) target = $region13
  $region12: #{_deep_mean_impl.1} parent=0 // pred_region
    _
  $region13: #{_deep_mean_impl.1} parent=0 // pred_fallthru
    _
  // Predicated region
  $region14: #{_deep_mean_impl.1} parent=0 // pred_check
    _
  $region15: #{_deep_mean_impl.1} parent=0 // pred_check_branch
    %21 = sbr.rel (0) target = $region17
  $region16: #{_deep_mean_impl.1} parent=0 // pred_region
    _
  $region17: #{_deep_mean_impl.1} parent=0 // pred_fallthru
    _
  // Predicated region
  $region18: #{_deep_mean_impl.1} parent=0 // pred_check
    _
  $region19: #{_deep_mean_impl.1} parent=0 // pred_check_branch
    %23 = sbr.rel (0) target = $region21
  $region20: #{_deep_mean_impl.1} parent=0 // pred_region
    _
  $region21: #{_deep_mean_impl.1} parent=0 // pred_fallthru
    _
  // Predicated region
  $region22: #{_deep_mean_impl.1} parent=0 // pred_check
    _
  $region23: #{_deep_mean_impl.1} parent=0 // pred_check_branch
    %25 = sbr.rel (0) target = $region25
  $region24: #{_deep_mean_impl.1} parent=0 // pred_region
    _
  $region25: #{_deep_mean_impl.1} parent=0 // pred_fallthru
    _
  // Predicated region
  $region26: #{_deep_mean_impl.1} parent=0 // pred_check
    _
  $region27: #{_deep_mean_impl.1} parent=0 // pred_check_branch
    %27 = sbr.rel (0) target = $region29
  $region28: #{_deep_mean_impl.1} parent=0 // pred_region
    _
  $region29: #{_deep_mean_impl.1} parent=0 // pred_fallthru
    _
  %v29 = vld [vmem:[%s0] sm:$0xf]
  %v30 = vld [vmem:[%s0 + $0x4] sm:$0xf]
  %v31 = vld [vmem:[%s0 + $0x8] sm:$0xf]
  %v32 = vld [vmem:[%s0 + $0xc] sm:$0xf]
  %v33 = vld [vmem:[%s0 + $0x10] sm:$0xf]
  %v34 = vld [vmem:[%s0 + $0x14] sm:$0xf]
  %v35 = vld [vmem:[%s0 + $0x18] sm:$0xf]
  %v36 = vld [vmem:[%s0 + $0x1c] sm:$0xf]
  %v37 = vld [vmem:[%s0 + $0x20] sm:$0xf]
  %v38 = vld [vmem:[%s0 + $0x24] sm:$0xf]
  %v39 = vld [vmem:[%s0 + $0x28] sm:$0xf]
  %v40 = vld [vmem:[%s0 + $0x2c] sm:$0xf]
  %v41 = vld [vmem:[%s0 + $0x30] sm:$0xf]
  %v42 = vld [vmem:[%s0 + $0x34] sm:$0xf]
  %v43 = vld [vmem:[%s0 + $0x38] sm:$0xf]
  %v44 = vld [vmem:[%s0 + $0x3c] sm:$0xf]
  %v45 = vld [vmem:[%s2] sm:$0x1]
  %v46 = vld [vmem:[%s4] sm:$0x1]
  %v47 = vld [vmem:[#allocation2] sm:$0x1]
  %v48 = vld [vmem:[%s1] sm:$0xf]
  %v49 = vld [vmem:[%s1 + $0x4] sm:$0xf]
  %v51 = vperm.slane %v45, 0
  %v69 = vunpack.c.l.b16 %v29
  %v70 = vunpack.c.l.b16 %v30
  %v71 = vunpack.c.l.b16 %v31
  %v72 = vunpack.c.l.b16 %v32
  %v73 = vunpack.c.l.b16 %v33
  %v74 = vunpack.c.l.b16 %v34
  %v75 = vunpack.c.l.b16 %v35
  %v76 = vunpack.c.l.b16 %v36
  %v77 = vunpack.c.l.b16 %v37
  %v78 = vunpack.c.l.b16 %v38
  %v79 = vunpack.c.l.b16 %v39
  %v80 = vunpack.c.l.b16 %v40
  %v81 = vunpack.c.l.b16 %v41
  %v82 = vunpack.c.l.b16 %v42
  %v83 = vunpack.c.l.b16 %v43
  %v84 = vunpack.c.l.b16 %v44
  %v85 = vpack.c.b16 %v70, %v69
  %v86 = vpack.c.b16 %v72, %v71
  %v87 = vpack.c.b16 %v74, %v73
  %v88 = vpack.c.b16 %v76, %v75
  %v89 = vpack.c.b16 %v78, %v77
  %v90 = vpack.c.b16 %v80, %v79
  %v91 = vpack.c.b16 %v82, %v81
  %v92 = vpack.c.b16 %v84, %v83
  %v95 = vunpack.c.l.b16 %v48
  %v96 = vunpack.c.l.b16 %v49
  %v97 = vpack.c.b16 %v96, %v95
  %vm99 = vcmask 130048
  %v101 = vsel %vm99, %v85, 0
  %v104 = vsel %vm99, %v86, 0
  %v107 = vsel %vm99, %v87, 0
  %v110 = vsel %vm99, %v88, 0
  %v113 = vsel %vm99, %v89, 0
  %v116 = vsel %vm99, %v90, 0
  %v119 = vsel %vm99, %v91, 0
  %v122 = vsel %vm99, %v92, 0
  %124 = vmatpush.bf16.msra.mxu0 0
  %125 = vmatpush.bf16.msra.mxu0 0
  %126 = vmatpush.bf16.msra.mxu0 0
  %127 = vmatpush.bf16.msra.mxu0 0
  %128 = vmatpush.bf16.msra.mxu0 0
  %129 = vmatpush.bf16.msra.mxu0 0
  %130 = vmatpush.bf16.msra.mxu0 0
  %131 = vmatpush.bf16.msra.mxu0 %v97
  %132 = vmatmul.bf16.gmra.mxu0 %v101
  %v133 = vpop.f32.mrf.mxu0
  %v134 = vadd.f32 %v51, %v133
  %v135 = vpop.f32.mrf.mxu0
  %v136 = vadd.f32 %v51, %v135
  %137 = vmatmul.bf16.gmra.mxu0 %v104
  %v138 = vpop.f32.mrf.mxu0
  %v139 = vadd.f32 %v51, %v138
  %v140 = vpop.f32.mrf.mxu0
  %v141 = vadd.f32 %v51, %v140
  %142 = vmatmul.bf16.gmra.mxu0 %v107
  %v143 = vpop.f32.mrf.mxu0
  %v144 = vadd.f32 %v51, %v143
  %v145 = vpop.f32.mrf.mxu0
  %v146 = vadd.f32 %v51, %v145
  %147 = vmatmul.bf16.gmra.mxu0 %v110
  %v148 = vpop.f32.mrf.mxu0
  %v149 = vadd.f32 %v51, %v148
  %v150 = vpop.f32.mrf.mxu0
  %v151 = vadd.f32 %v51, %v150
  %152 = vmatmul.bf16.gmra.mxu0 %v113
  %v153 = vpop.f32.mrf.mxu0
  %v154 = vadd.f32 %v51, %v153
  %v155 = vpop.f32.mrf.mxu0
  %v156 = vadd.f32 %v51, %v155
  %157 = vmatmul.bf16.gmra.mxu0 %v116
  %v158 = vpop.f32.mrf.mxu0
  %v159 = vadd.f32 %v51, %v158
  %v160 = vpop.f32.mrf.mxu0
  %v161 = vadd.f32 %v51, %v160
  %162 = vmatmul.bf16.gmra.mxu0 %v119
  %v163 = vpop.f32.mrf.mxu0
  %v164 = vadd.f32 %v51, %v163
  %v165 = vpop.f32.mrf.mxu0
  %v166 = vadd.f32 %v51, %v165
  %167 = vmatmul.bf16.gmra.mxu0 %v122
  %v168 = vpop.f32.mrf.mxu0
  %v169 = vadd.f32 %v51, %v168
  %v170 = vpop.f32.mrf.mxu0
  %v171 = vadd.f32 %v51, %v170
  %172 = vdwg.mxu0
  %v173 = vmax.f32 %v134, 0.0
  %v174 = vmax.f32 %v136, 0.0
  %v175 = vmax.f32 %v139, 0.0
  %v176 = vmax.f32 %v141, 0.0
  %v177 = vmax.f32 %v144, 0.0
  %v178 = vmax.f32 %v146, 0.0
  %v179 = vmax.f32 %v149, 0.0
  %v180 = vmax.f32 %v151, 0.0
  %v181 = vmax.f32 %v154, 0.0
  %v182 = vmax.f32 %v156, 0.0
  %v183 = vmax.f32 %v159, 0.0
  %v184 = vmax.f32 %v161, 0.0
  %v185 = vmax.f32 %v164, 0.0
  %v186 = vmax.f32 %v166, 0.0
  %v187 = vmax.f32 %v169, 0.0
  %v188 = vmax.f32 %v171, 0.0
  %v189 = vpack.c.bf16 %v174, %v173
  %v190 = vpack.c.bf16 %v176, %v175
  %v191 = vpack.c.bf16 %v178, %v177
  %v192 = vpack.c.bf16 %v180, %v179
  %v193 = vpack.c.bf16 %v182, %v181
  %v194 = vpack.c.bf16 %v184, %v183
  %v195 = vpack.c.bf16 %v186, %v185
  %v196 = vpack.c.bf16 %v188, %v187
  %v197 = vld [vmem:[%s3] sm:$0xf]
  %v198 = vld [vmem:[%s3 + $0x4] sm:$0xf]
  %v199 = vld [vmem:[%s3 + $0x8] sm:$0xf]
  %v200 = vld [vmem:[%s3 + $0xc] sm:$0xf]
  %v201 = vld [vmem:[%s3 + $0x10] sm:$0xf]
  %v202 = vld [vmem:[%s3 + $0x14] sm:$0xf]
  %v203 = vld [vmem:[%s3 + $0x18] sm:$0xf]
  %v204 = vld [vmem:[%s3 + $0x1c] sm:$0xf]
  %v205 = vld [vmem:[%s3 + $0x20] sm:$0xf]
  %v206 = vld [vmem:[%s3 + $0x24] sm:$0xf]
  %v207 = vld [vmem:[%s3 + $0x28] sm:$0xf]
  %v208 = vld [vmem:[%s3 + $0x2c] sm:$0xf]
  %v209 = vld [vmem:[%s3 + $0x30] sm:$0xf]
  %v210 = vld [vmem:[%s3 + $0x34] sm:$0xf]
  %v211 = vld [vmem:[%s3 + $0x38] sm:$0xf]
  %v212 = vld [vmem:[%s3 + $0x3c] sm:$0xf]
  %v214 = vperm.slane %v46, 0
  %v232 = vunpack.c.l.b16 %v197
  %v233 = vunpack.c.l.b16 %v198
  %v234 = vunpack.c.l.b16 %v199
  %v235 = vunpack.c.l.b16 %v200
  %v236 = vunpack.c.l.b16 %v201
  %v237 = vunpack.c.l.b16 %v202
  %v238 = vunpack.c.l.b16 %v203
  %v239 = vunpack.c.l.b16 %v204
  %v240 = vunpack.c.l.b16 %v205
  %v241 = vunpack.c.l.b16 %v206
  %v242 = vunpack.c.l.b16 %v207
  %v243 = vunpack.c.l.b16 %v208
  %v244 = vunpack.c.l.b16 %v209
  %v245 = vunpack.c.l.b16 %v210
  %v246 = vunpack.c.l.b16 %v211
  %v247 = vunpack.c.l.b16 %v212
  %v248 = vpack.c.b16 %v233, %v232
  %v249 = vpack.c.b16 %v235, %v234
  %v250 = vpack.c.b16 %v237, %v236
  %v251 = vpack.c.b16 %v239, %v238
  %v252 = vpack.c.b16 %v241, %v240
  %v253 = vpack.c.b16 %v243, %v242
  %v254 = vpack.c.b16 %v245, %v244
  %v255 = vpack.c.b16 %v247, %v246
  %264 = vmatpush.bf16.msra.mxu0 %v255
  %265 = vmatpush.bf16.msra.mxu0 %v254
  %266 = vmatpush.bf16.msra.mxu0 %v253
  %267 = vmatpush.bf16.msra.mxu0 %v252
  %268 = vmatpush.bf16.msra.mxu0 %v251
  %269 = vmatpush.bf16.msra.mxu0 %v250
  %270 = vmatpush.bf16.msra.mxu0 %v249
  %271 = vmatpush.bf16.msra.mxu0 %v248
  %272 = vmatmul.bf16.gmra.mxu0 %v189
  %v273 = vpop.f32.mrf.mxu0
  %v274 = vadd.f32 %v214, %v273
  %v275 = vpop.f32.mrf.mxu0
  %v276 = vadd.f32 %v214, %v275
  %277 = vmatmul.bf16.gmra.mxu0 %v190
  %v278 = vpop.f32.mrf.mxu0
  %v279 = vadd.f32 %v214, %v278
  %v280 = vpop.f32.mrf.mxu0
  %v281 = vadd.f32 %v214, %v280
  %282 = vmatmul.bf16.gmra.mxu0 %v191
  %v283 = vpop.f32.mrf.mxu0
  %v284 = vadd.f32 %v214, %v283
  %v285 = vpop.f32.mrf.mxu0
  %v286 = vadd.f32 %v214, %v285
  %287 = vmatmul.bf16.gmra.mxu0 %v192
  %v288 = vpop.f32.mrf.mxu0
  %v289 = vadd.f32 %v214, %v288
  %v290 = vpop.f32.mrf.mxu0
  %v291 = vadd.f32 %v214, %v290
  %292 = vmatmul.bf16.gmra.mxu0 %v193
  %v293 = vpop.f32.mrf.mxu0
  %v294 = vadd.f32 %v214, %v293
  %v295 = vpop.f32.mrf.mxu0
  %v296 = vadd.f32 %v214, %v295
  %297 = vmatmul.bf16.gmra.mxu0 %v194
  %v298 = vpop.f32.mrf.mxu0
  %v299 = vadd.f32 %v214, %v298
  %v300 = vpop.f32.mrf.mxu0
  %v301 = vadd.f32 %v214, %v300
  %302 = vmatmul.bf16.gmra.mxu0 %v195
  %v303 = vpop.f32.mrf.mxu0
  %v304 = vadd.f32 %v214, %v303
  %v305 = vpop.f32.mrf.mxu0
  %v306 = vadd.f32 %v214, %v305
  %307 = vmatmul.bf16.gmra.mxu0 %v196
  %v308 = vpop.f32.mrf.mxu0
  %v309 = vadd.f32 %v214, %v308
  %v310 = vpop.f32.mrf.mxu0
  %v311 = vadd.f32 %v214, %v310
  %312 = vdwg.mxu0
  %v313 = vmax.f32 %v274, 0.0
  %v314 = vmax.f32 %v276, 0.0
  %v315 = vmax.f32 %v279, 0.0
  %v316 = vmax.f32 %v281, 0.0
  %v317 = vmax.f32 %v284, 0.0
  %v318 = vmax.f32 %v286, 0.0
  %v319 = vmax.f32 %v289, 0.0
  %v320 = vmax.f32 %v291, 0.0
  %v321 = vmax.f32 %v294, 0.0
  %v322 = vmax.f32 %v296, 0.0
  %v323 = vmax.f32 %v299, 0.0
  %v324 = vmax.f32 %v301, 0.0
  %v325 = vmax.f32 %v304, 0.0
  %v326 = vmax.f32 %v306, 0.0
  %v327 = vmax.f32 %v309, 0.0
  %v328 = vmax.f32 %v311, 0.0
  %v329 = vld [vmem:[%s5] sm:$0x1]
  %v330 = vpack.c.bf16 %v314, %v313
  %v331 = vpack.c.bf16 %v316, %v315
  %v332 = vpack.c.bf16 %v318, %v317
  %v333 = vpack.c.bf16 %v320, %v319
  %v334 = vpack.c.bf16 %v322, %v321
  %v335 = vpack.c.bf16 %v324, %v323
  %v336 = vpack.c.bf16 %v326, %v325
  %v337 = vpack.c.bf16 %v328, %v327
  %339 = vset.pattern.permute.xlu0 0
  %340 = vperm.xlu0 %339, %v47
  %v341 = vpop.permute.xlu0 %340
  %v343 = vperm.slane %v341, 0
  %344 = vmatpush.bf16.xpose.msra.mxu0 %v337
  %345 = vmatpush.bf16.xpose.msra.mxu0 %v336
  %346 = vmatpush.bf16.xpose.msra.mxu0 %v335
  %347 = vmatpush.bf16.xpose.msra.mxu0 %v334
  %348 = vmatpush.bf16.xpose.msra.mxu0 %v333
  %349 = vmatpush.bf16.xpose.msra.mxu0 %v332
  %350 = vmatpush.bf16.xpose.msra.mxu0 %v331
  %351 = vmatpush.bf16.xpose.msra.mxu0 %v330
  %352 = vmatmul.bf16.gmra.mxu0 %v329
  %v353 = vpop.f32.mrf.mxu0
  %v354 = vadd.f32 %v343, %v353
  %v355 = vpop.f32.mrf.mxu0
  %356 = vdwg.mxu0
  %357 = vst [vmem:[%s7] sm:$0x1] %v354
  // Predicated region
  $region30: #{_deep_mean_impl.1} parent=0 // pred_check
    _
  $region31: #{_deep_mean_impl.1} parent=0 // pred_check_branch
    %359 = sbr.rel (0) target = $region33
  $region32: #{_deep_mean_impl.1} parent=0 // pred_region
    _
  $region33: #{_deep_mean_impl.1} parent=0 // pred_fallthru
    _
  // Predicated region
  $region34: #{_deep_mean_impl.1} parent=0 // pred_check
    _
  $region35: #{_deep_mean_impl.1} parent=0 // pred_check_branch
    %361 = sbr.rel (0) target = $region37
  $region36: #{_deep_mean_impl.1} parent=0 // pred_region
    _
  $region37: #{_deep_mean_impl.1} parent=0 // pred_fallthru
    _

</llo_original>
